<compile_context>
chip_gen: v7x
topology: tpu7x:2x2x1
jax: 0.10.0
libtpu: 0.0.40
codegen_flags: <defaults>
</compile_context>

<pallas_src>
import functools

import jax
import jax.numpy as jnp
from jax.experimental import pallas as pl
from jax.experimental.pallas import tpu as pltpu


def policy_kernel(x_ref, w1_ref, b1_ref, w2_ref, b2_ref, oT_ref, *, hidden_chunk):
    hidden = w1_ref.shape[0]
    n_out = w2_ref.shape[0]
    tb = x_ref.shape[0]

    # One lane<->sublane flip per tile (XLU is otherwise idle), then bf16 for
    # the MXU.  All elementwise math below stays f32 (v5e has no bf16 VPU/EUP).
    xT_bf = x_ref[...].T.astype(jnp.bfloat16)                      # (8, tb)

    acc = jnp.zeros((n_out, tb), jnp.float32)
    for c in range(hidden // hidden_chunk):
        w1c = w1_ref[pl.ds(c * hidden_chunk, hidden_chunk), :]     # (hc, 8)  bf16
        b1c = b1_ref[pl.ds(c * hidden_chunk, hidden_chunk), :]     # (hc, 1)  f32
        w2c = w2_ref[:, pl.ds(c * hidden_chunk, hidden_chunk)]     # (4, hc)  bf16

        # layer1 chunk: (hc, 8) @ (8, tb) -> (hc, tb); f32 accumulate.
        h = jnp.dot(w1c, xT_bf, preferred_element_type=jnp.float32)
        h = jnp.maximum(h + b1c, 0.0)                              # bias + ReLU, f32

        # layer2 partial sum over this hidden chunk: (4, hc) @ (hc, tb).
        acc = acc + jnp.dot(w2c, h.astype(jnp.bfloat16),
                            preferred_element_type=jnp.float32)    # (4, tb)

    logits = acc + b2_ref[...]                                     # (4, tb)

    # Numerically-stable softmax over the 4 action rows (sublane/XLU reduce).
    m = jnp.max(logits, axis=0, keepdims=True)                     # (1, tb)
    e = jnp.exp(logits - m)                                        # (4, tb)
    denom = jnp.sum(e, axis=0, keepdims=True)                      # (1, tb)
    inv = pl.reciprocal(denom, approx=True)                        # EUP slot, ~free
    oT_ref[...] = (e * inv).astype(oT_ref.dtype)


def _round_up(v, m):
    return ((v + m - 1) // m) * m


def _select_batch_tile(batch, max_tb=4096):
    """Batch tile: multiple of 128 (lane-dense output), >=2 grid steps when the
    batch allows (v7x megacore), capped so per-tile VMEM fits v5e/v6e/v7x."""
    tb = _round_up(max(1, (batch + 1) // 2), 128)
    return int(max(128, min(tb, max_tb)))


def policy_forward(x, w1, b1, w2, b2, *, tb=None, hidden_chunk=128, batch_major=True):
    """x: (B, 8); w1: (256, 8); b1: (256,); w2: (4, 256); b2: (4,) (PyTorch layout).

    Returns softmax probabilities, shape (B, 4) (or (4, B) if batch_major=False,
    which skips the final wrapper transpose for on-device consumers).
    """
    B, in_features = x.shape
    hidden = w1.shape[0]
    n_out = w2.shape[0]
    assert hidden % hidden_chunk == 0

    if tb is None:
        tb = _select_batch_tile(B)
    num_tiles = pl.cdiv(B, tb)

    # MXU-native bf16 weights (tiny, VMEM-resident); biases stay f32.
    w1_bf = w1.astype(jnp.bfloat16)
    w2_bf = w2.astype(jnp.bfloat16)
    b1c = b1.reshape(hidden, 1).astype(jnp.float32)
    b2c = b2.reshape(n_out, 1).astype(jnp.float32)

    kernel = functools.partial(policy_kernel, hidden_chunk=hidden_chunk)

    outT = pl.pallas_call(
        kernel,
        out_shape=jax.ShapeDtypeStruct((n_out, B), jnp.float32),
        grid=(num_tiles,),
        in_specs=[
            # Batch-tiled input in natural (B, 8) layout (contiguous HBM reads).
            pl.BlockSpec((tb, in_features), lambda i: (i, 0)),
            # Weights / biases VMEM-resident across the grid (constant index_map).
            pl.BlockSpec((hidden, in_features), lambda i: (0, 0)),
            pl.BlockSpec((hidden, 1), lambda i: (0, 0)),
            pl.BlockSpec((n_out, hidden), lambda i: (0, 0)),
            pl.BlockSpec((n_out, 1), lambda i: (0, 0)),
        ],
        out_specs=pl.BlockSpec((n_out, tb), lambda i: (0, i)),
        compiler_params=pltpu.CompilerParams(
            dimension_semantics=("parallel",),
            vmem_limit_bytes=32 * 1024 * 1024,
        ),
    )(x, w1_bf, b1c, w2_bf, b2c)

    if batch_major:
        return outT.T                      # (B, 4) — matches the PyTorch forward
    return outT                            # (4, B) lane-dense, no extra transpose


def init_params(key):
    """Deterministic init mimicking PyTorch nn.Linear (uniform +/- 1/sqrt(fan_in)),
    in PyTorch (out_features, in_features) weight layout."""
    in1, hid, out = 8, 256, 4
    k1, k2, k3, k4 = jax.random.split(key, 4)
    bound1 = 1.0 / jnp.sqrt(in1)
    bound2 = 1.0 / jnp.sqrt(hid)
    w1 = jax.random.uniform(k1, (hid, in1), jnp.float32, -bound1, bound1)
    b1 = jax.random.uniform(k2, (hid,), jnp.float32, -bound1, bound1)
    w2 = jax.random.uniform(k3, (out, hid), jnp.float32, -bound2, bound2)
    b2 = jax.random.uniform(k4, (out,), jnp.float32, -bound2, bound2)
    return w1, b1, w2, b2


def reference_forward(x, w1, b1, w2, b2):
    h = jnp.maximum(x @ w1.T + b1, 0.0)
    logits = h @ w2.T + b2
    return jax.nn.softmax(logits, axis=-1)


if __name__ == "__main__":
    key = jax.random.PRNGKey(0)
    k_x, k_p, k_x2 = jax.random.split(key, 3)

    w1, b1, w2, b2 = init_params(k_p)

    # Small-shape check (single grid step, batch smaller than the tile).
    batch = 2
    x = jax.random.normal(k_x, (batch, 8), jnp.float32)
    out = jax.block_until_ready(policy_forward(x, w1, b1, w2, b2))
    ref = reference_forward(x, w1, b1, w2, b2)
    assert out.shape == (batch, 4)
    # bf16 MXU operands + approx reciprocal -> slightly loosened tolerance.
    assert jnp.allclose(out, ref, atol=1e-2, rtol=1e-2), float(jnp.max(jnp.abs(out - ref)))
    assert jnp.allclose(jnp.sum(out, axis=-1), jnp.ones((batch,)), atol=5e-3)

    # Multi-tile + ragged-last-block check (grid of 2, partial final block).
    batch2 = 300
    x2 = jax.random.normal(k_x2, (batch2, 8), jnp.float32)
    out2 = jax.block_until_ready(policy_forward(x2, w1, b1, w2, b2))
    ref2 = reference_forward(x2, w1, b1, w2, b2)
    assert out2.shape == (batch2, 4)
    assert jnp.allclose(out2, ref2, atol=1e-2, rtol=1e-2), float(jnp.max(jnp.abs(out2 - ref2)))

    print("KERNEL_OK")
</pallas_src>

<mosaic_0001>
module attributes {stable_mosaic.version = 11 : i64} {
  func.func @policy_kernel(%arg0: i32, %arg1: memref<128x8xf32, #tpu.memory_space<vmem>>, %arg2: memref<256x8xbf16, #tpu.memory_space<vmem>>, %arg3: memref<256x1xf32, #tpu.memory_space<vmem>>, %arg4: memref<4x256xbf16, #tpu.memory_space<vmem>>, %arg5: memref<4x1xf32, #tpu.memory_space<vmem>>, %arg6: memref<4x128xf32, #tpu.memory_space<vmem>>) attributes {dimension_semantics = [#tpu.dimension_semantics<parallel>], iteration_bounds = array<i64: 1>, scalar_prefetch = 0 : i64, scratch_operands = 0 : i64, tpu.core_type = #tpu.core_type<tc>, window_params = [{transform_indices = @transform_0, window_bounds = array<i64: 128, 8>}, {pipeline_mode = #tpu.pipeline_mode<synchronous>, transform_indices = @transform_1, window_bounds = array<i64: 256, 8>}, {pipeline_mode = #tpu.pipeline_mode<synchronous>, transform_indices = @transform_2, window_bounds = array<i64: 256, 1>}, {pipeline_mode = #tpu.pipeline_mode<synchronous>, transform_indices = @transform_3, window_bounds = array<i64: 4, 256>}, {pipeline_mode = #tpu.pipeline_mode<synchronous>, transform_indices = @transform_4, window_bounds = array<i64: 4, 1>}, {transform_indices = @transform_5, window_bounds = array<i64: 4, 128>}]} {
    %c0 = arith.constant 0 : index
    %c0_0 = arith.constant 0 : index
    %0 = vector.load %arg1[%c0, %c0_0] : memref<128x8xf32, #tpu.memory_space<vmem>>, vector<128x8xf32>
    %1 = tpu.transpose %0, [1, 0] : vector<128x8xf32> -> vector<8x128xf32>
    %2 = arith.truncf %1 : vector<8x128xf32> to vector<8x128xbf16>
    %cst = arith.constant 0.000000e+00 : f32
    %3 = vector.broadcast %cst : f32 to vector<4x128xf32>
    %c0_1 = arith.constant 0 : index
    %c0_2 = arith.constant 0 : index
    %4 = vector.load %arg2[%c0_1, %c0_2] : memref<256x8xbf16, #tpu.memory_space<vmem>>, vector<128x8xbf16>
    %c0_3 = arith.constant 0 : index
    %c0_4 = arith.constant 0 : index
    %5 = vector.load %arg3[%c0_3, %c0_4] : memref<256x1xf32, #tpu.memory_space<vmem>>, vector<128x1xf32>
    %c0_5 = arith.constant 0 : index
    %c0_6 = arith.constant 0 : index
    %6 = vector.load %arg4[%c0_5, %c0_6] : memref<4x256xbf16, #tpu.memory_space<vmem>>, vector<4x128xbf16>
    %cst_7 = arith.constant dense<0.000000e+00> : vector<128x128xf32>
    %7 = tpu.matmul %4, %2, %cst_7 {dimension_numbers = #tpu.dot_dimension_numbers<[1], [0], [0], [1], [0, 0, 1, 1], [], []>} : vector<128x8xbf16>, vector<8x128xbf16>, vector<128x128xf32> -> vector<128x128xf32>
    %8 = vector.broadcast %5 : vector<128x1xf32> to vector<128x128xf32>
    %9 = arith.addf %7, %8 : vector<128x128xf32>
    %cst_8 = arith.constant 0.000000e+00 : f32
    %10 = vector.broadcast %cst_8 : f32 to vector<128x128xf32>
    %11 = arith.maximumf %9, %10 : vector<128x128xf32>
    %12 = arith.truncf %11 : vector<128x128xf32> to vector<128x128xbf16>
    %cst_9 = arith.constant dense<0.000000e+00> : vector<4x128xf32>
    %13 = tpu.matmul %6, %12, %cst_9 {dimension_numbers = #tpu.dot_dimension_numbers<[1], [0], [0], [1], [0, 0, 1, 1], [], []>} : vector<4x128xbf16>, vector<128x128xbf16>, vector<4x128xf32> -> vector<4x128xf32>
    %14 = arith.addf %3, %13 : vector<4x128xf32>
    %c128 = arith.constant 128 : index
    %c0_10 = arith.constant 0 : index
    %15 = vector.load %arg2[%c128, %c0_10] : memref<256x8xbf16, #tpu.memory_space<vmem>>, vector<128x8xbf16>
    %c128_11 = arith.constant 128 : index
    %c0_12 = arith.constant 0 : index
    %16 = vector.load %arg3[%c128_11, %c0_12] : memref<256x1xf32, #tpu.memory_space<vmem>>, vector<128x1xf32>
    %c0_13 = arith.constant 0 : index
    %c128_14 = arith.constant 128 : index
    %17 = vector.load %arg4[%c0_13, %c128_14] : memref<4x256xbf16, #tpu.memory_space<vmem>>, vector<4x128xbf16>
    %cst_15 = arith.constant dense<0.000000e+00> : vector<128x128xf32>
    %18 = tpu.matmul %15, %2, %cst_15 {dimension_numbers = #tpu.dot_dimension_numbers<[1], [0], [0], [1], [0, 0, 1, 1], [], []>} : vector<128x8xbf16>, vector<8x128xbf16>, vector<128x128xf32> -> vector<128x128xf32>
    %19 = vector.broadcast %16 : vector<128x1xf32> to vector<128x128xf32>
    %20 = arith.addf %18, %19 : vector<128x128xf32>
    %cst_16 = arith.constant 0.000000e+00 : f32
    %21 = vector.broadcast %cst_16 : f32 to vector<128x128xf32>
    %22 = arith.maximumf %20, %21 : vector<128x128xf32>
    %23 = arith.truncf %22 : vector<128x128xf32> to vector<128x128xbf16>
    %cst_17 = arith.constant dense<0.000000e+00> : vector<4x128xf32>
    %24 = tpu.matmul %17, %23, %cst_17 {dimension_numbers = #tpu.dot_dimension_numbers<[1], [0], [0], [1], [0, 0, 1, 1], [], []>} : vector<4x128xbf16>, vector<128x128xbf16>, vector<4x128xf32> -> vector<4x128xf32>
    %25 = arith.addf %14, %24 : vector<4x128xf32>
    %c0_18 = arith.constant 0 : index
    %c0_19 = arith.constant 0 : index
    %26 = vector.load %arg5[%c0_18, %c0_19] : memref<4x1xf32, #tpu.memory_space<vmem>>, vector<4x1xf32>
    %27 = vector.broadcast %26 : vector<4x1xf32> to vector<4x128xf32>
    %28 = arith.addf %25, %27 : vector<4x128xf32>
    %cst_20 = arith.constant dense<0xFF800000> : vector<128xf32>
    %29 = vector.multi_reduction <maximumf>, %28, %cst_20 [0] : vector<4x128xf32> to vector<128xf32>
    %30 = vector.shape_cast %29 : vector<128xf32> to vector<1x128xf32>
    %31 = vector.broadcast %30 : vector<1x128xf32> to vector<4x128xf32>
    %32 = arith.subf %28, %31 : vector<4x128xf32>
    %33 = math.exp %32 : vector<4x128xf32>
    %cst_21 = arith.constant dense<0.000000e+00> : vector<128xf32>
    %34 = vector.multi_reduction <add>, %33, %cst_21 [0] : vector<4x128xf32> to vector<128xf32>
    %35 = vector.shape_cast %34 : vector<128xf32> to vector<1x128xf32>
    %36 = tpu.reciprocal %35 {approx = true} : vector<1x128xf32> -> vector<1x128xf32>
    %37 = vector.broadcast %36 : vector<1x128xf32> to vector<4x128xf32>
    %38 = arith.mulf %33, %37 : vector<4x128xf32>
    %c0_22 = arith.constant 0 : index
    %c0_23 = arith.constant 0 : index
    %39 = vector.load %arg6[%c0_22, %c0_23] : memref<4x128xf32, #tpu.memory_space<vmem>>, vector<4x128xf32>
    tpu.vector_store %arg6[%c0_22, %c0_23], %38 {strides = array<i32>} : memref<4x128xf32, #tpu.memory_space<vmem>>, vector<4x128xf32>,
    return
  }
  func.func @transform_0(%arg0: i32) -> (i32, i32) {
    %c0_i32 = arith.constant 0 : i32
    %c0_i32_0 = arith.constant 0 : i32
    return %arg0, %c0_i32 : i32, i32
  }
  func.func @transform_1(%arg0: i32) -> (i32, i32) {
    %c0_i32 = arith.constant 0 : i32
    %c0_i32_0 = arith.constant 0 : i32
    %c0_i32_1 = arith.constant 0 : i32
    return %c0_i32, %c0_i32_0 : i32, i32
  }
  func.func @transform_2(%arg0: i32) -> (i32, i32) {
    %c0_i32 = arith.constant 0 : i32
    %c0_i32_0 = arith.constant 0 : i32
    %c0_i32_1 = arith.constant 0 : i32
    return %c0_i32, %c0_i32_0 : i32, i32
  }
  func.func @transform_3(%arg0: i32) -> (i32, i32) {
    %c0_i32 = arith.constant 0 : i32
    %c0_i32_0 = arith.constant 0 : i32
    %c0_i32_1 = arith.constant 0 : i32
    return %c0_i32, %c0_i32_0 : i32, i32
  }
  func.func @transform_4(%arg0: i32) -> (i32, i32) {
    %c0_i32 = arith.constant 0 : i32
    %c0_i32_0 = arith.constant 0 : i32
    %c0_i32_1 = arith.constant 0 : i32
    return %c0_i32, %c0_i32_0 : i32, i32
  }
  func.func @transform_5(%arg0: i32) -> (i32, i32) {
    %c0_i32 = arith.constant 0 : i32
    %c0_i32_0 = arith.constant 0 : i32
    return %c0_i32, %arg0 : i32, i32
  }
}

</mosaic_0001>

<llo_original>
// kernel: tpu_custom_call.1
$region0: #{tpu_custom_call.1}
  #allocation0 [shape = 'u32[]', space=smem, size = 0x4, offset = 0x4, fixed_abs, tag = 'smem constant byte address 0x4 - core index']
  #allocation1 [shape = 'u32[144,128]{1,0:T(1,128)}', space=vmem, size = 0x12000, scoped, tag = 'internal scratch']
  %s0 = inlined_call_operand.vmem [shape: f32[2,8], index: 0, kind: input, shape index: {}]
  %s1 = inlined_call_operand.vmem [shape: bf16[256,8], index: 1, kind: input, shape index: {}]
  %s2 = inlined_call_operand.vmem [shape: f32[256,1], index: 2, kind: input, shape index: {}]
  %s3 = inlined_call_operand.vmem [shape: bf16[4,256], index: 3, kind: input, shape index: {}]
  %s4 = inlined_call_operand.vmem [shape: f32[4,1], index: 4, kind: input, shape index: {}]
  %s5 = inlined_call_operand.vmem [shape: f32[4,2], index: 5, kind: output, shape index: {}]
  %s6 = sld [smem:[#allocation0]]
  $region30: #{tpu_custom_call.1} parent=0
    _
  %s8 = ssub.s32 1, %s6
  %s9 = scalar_select 0, %s8, %s6
  // Predicated region
  $region2: #{tpu_custom_call.1} parent=0 // pred_check
    _
  $region3: #{tpu_custom_call.1} parent=0 // pred_check_branch
    %11 = sbr.rel (0) target = $region5
  $region4: #{tpu_custom_call.1} parent=0 // pred_region
    _
  $region5: #{tpu_custom_call.1} parent=0 // pred_fallthru
    _
  // Predicated region
  $region6: #{tpu_custom_call.1} parent=0 // pred_check
    _
  $region7: #{tpu_custom_call.1} parent=0 // pred_check_branch
    %13 = sbr.rel (0) target = $region9
  $region8: #{tpu_custom_call.1} parent=0 // pred_region
    _
  $region9: #{tpu_custom_call.1} parent=0 // pred_fallthru
    _
  // Predicated region
  $region10: #{tpu_custom_call.1} parent=0 // pred_check
    _
  $region11: #{tpu_custom_call.1} parent=0 // pred_check_branch
    %15 = sbr.rel (0) target = $region13
  $region12: #{tpu_custom_call.1} parent=0 // pred_region
    _
  $region13: #{tpu_custom_call.1} parent=0 // pred_fallthru
    _
  // Predicated region
  $region14: #{tpu_custom_call.1} parent=0 // pred_check
    _
  $region15: #{tpu_custom_call.1} parent=0 // pred_check_branch
    %17 = sbr.rel (0) target = $region17
  $region16: #{tpu_custom_call.1} parent=0 // pred_region
    _
  $region17: #{tpu_custom_call.1} parent=0 // pred_fallthru
    _
  // Predicated region
  $region18: #{tpu_custom_call.1} parent=0 // pred_check
    _
  $region19: #{tpu_custom_call.1} parent=0 // pred_check_branch
    %19 = sbr.rel (0) target = $region21
  $region20: #{tpu_custom_call.1} parent=0 // pred_region
    _
  $region21: #{tpu_custom_call.1} parent=0 // pred_fallthru
    _
  %v21 = vld [vmem:[%s0] sm:$0xff]
  %v22 = vld [vmem:[%s0 + $0x8] sm:$0xff]
  %v23 = vld [vmem:[%s0 + $0x10] sm:$0xff]
  %v24 = vld [vmem:[%s0 + $0x18] sm:$0xff]
  %v25 = vld [vmem:[%s0 + $0x20] sm:$0xff]
  %v26 = vld [vmem:[%s0 + $0x28] sm:$0xff]
  %v27 = vld [vmem:[%s0 + $0x30] sm:$0xff]
  %v28 = vld [vmem:[%s0 + $0x38] sm:$0xff]
  %v29 = vld [vmem:[%s0 + $0x40] sm:$0xff]
  %v30 = vld [vmem:[%s0 + $0x48] sm:$0xff]
  %v31 = vld [vmem:[%s0 + $0x50] sm:$0xff]
  %v32 = vld [vmem:[%s0 + $0x58] sm:$0xff]
  %v33 = vld [vmem:[%s0 + $0x60] sm:$0xff]
  %v34 = vld [vmem:[%s0 + $0x68] sm:$0xff]
  %v35 = vld [vmem:[%s0 + $0x70] sm:$0xff]
  %v36 = vld [vmem:[%s0 + $0x78] sm:$0xff]
  %37 = vxpose.xlu0.b32.start [1/16] %v21, 128
  %38 = vxpose.xlu0.b32.cont [2/16] %v22, 128
  %39 = vxpose.xlu0.b32.cont [3/16] %v23, 128
  %40 = vxpose.xlu0.b32.cont [4/16] %v24, 128
  %41 = vxpose.xlu0.b32.cont [5/16] %v25, 128
  %42 = vxpose.xlu0.b32.cont [6/16] %v26, 128
  %43 = vxpose.xlu0.b32.cont [7/16] %v27, 128
  %44 = vxpose.xlu0.b32.cont [8/16] %v28, 128
  %45 = vxpose.xlu0.b32.cont [9/16] %v29, 128
  %46 = vxpose.xlu0.b32.cont [10/16] %v30, 128
  %47 = vxpose.xlu0.b32.cont [11/16] %v31, 128
  %48 = vxpose.xlu0.b32.cont [12/16] %v32, 128
  %49 = vxpose.xlu0.b32.cont [13/16] %v33, 128
  %50 = vxpose.xlu0.b32.cont [14/16] %v34, 128
  %51 = vxpose.xlu0.b32.cont [15/16] %v35, 128
  %52 = vxpose.xlu0.b32.end [16/16] %v36, 128
  %v53 = vpop.trf.xlu0
  %v54 = vpop.trf.xlu0
  %v55 = vpop.trf.xlu0
  %v56 = vpop.trf.xlu0
  %v57 = vpop.trf.xlu0
  %v58 = vpop.trf.xlu0
  %v59 = vpop.trf.xlu0
  %v60 = vpop.trf.xlu0
  %v61 = vpop.trf.xlu0
  %v62 = vpop.trf.xlu0
  %v63 = vpop.trf.xlu0
  %v64 = vpop.trf.xlu0
  %v65 = vpop.trf.xlu0
  %v66 = vpop.trf.xlu0
  %v67 = vpop.trf.xlu0
  %v68 = vpop.trf.xlu0
  %v69 = vpack.c.bf16 %v53, %v53
  %v70 = vld [vmem:[%s1] sm:$0xf]
  %v71 = vld [vmem:[%s1 + $0x4] sm:$0xf]
  %v72 = vld [vmem:[%s1 + $0x8] sm:$0xf]
  %v73 = vld [vmem:[%s1 + $0xc] sm:$0xf]
  %v74 = vld [vmem:[%s1 + $0x10] sm:$0xf]
  %v75 = vld [vmem:[%s1 + $0x14] sm:$0xf]
  %v76 = vld [vmem:[%s1 + $0x18] sm:$0xf]
  %v77 = vld [vmem:[%s1 + $0x1c] sm:$0xf]
  %v78 = vld [vmem:[%s1 + $0x20] sm:$0xf]
  %v79 = vld [vmem:[%s1 + $0x24] sm:$0xf]
  %v80 = vld [vmem:[%s1 + $0x28] sm:$0xf]
  %v81 = vld [vmem:[%s1 + $0x2c] sm:$0xf]
  %v82 = vld [vmem:[%s1 + $0x30] sm:$0xf]
  %v83 = vld [vmem:[%s1 + $0x34] sm:$0xf]
  %v84 = vld [vmem:[%s1 + $0x38] sm:$0xf]
  %v85 = vld [vmem:[%s1 + $0x3c] sm:$0xf]
  %v86 = vld [vmem:[%s2] sm:$0xff]
  %v87 = vld [vmem:[%s2 + $0x8] sm:$0xff]
  %v88 = vld [vmem:[%s2 + $0x10] sm:$0xff]
  %v89 = vld [vmem:[%s2 + $0x18] sm:$0xff]
  %v90 = vld [vmem:[%s2 + $0x20] sm:$0xff]
  %v91 = vld [vmem:[%s2 + $0x28] sm:$0xff]
  %v92 = vld [vmem:[%s2 + $0x30] sm:$0xff]
  %v93 = vld [vmem:[%s2 + $0x38] sm:$0xff]
  %v94 = vld [vmem:[%s2 + $0x40] sm:$0xff]
  %v95 = vld [vmem:[%s2 + $0x48] sm:$0xff]
  %v96 = vld [vmem:[%s2 + $0x50] sm:$0xff]
  %v97 = vld [vmem:[%s2 + $0x58] sm:$0xff]
  %v98 = vld [vmem:[%s2 + $0x60] sm:$0xff]
  %v99 = vld [vmem:[%s2 + $0x68] sm:$0xff]
  %v100 = vld [vmem:[%s2 + $0x70] sm:$0xff]
  %v101 = vld [vmem:[%s2 + $0x78] sm:$0xff]
  %v102 = vld [vmem:[%s3] sm:$0x3]
  %104 = vset.pattern.permute.xlu0 0
  %105 = vperm.xlu0 %104, %v86
  %v106 = vpop.permute.xlu0 %105
  %109 = vset.pattern.permute.xlu0 0
  %110 = vperm.xlu0 %109, %v87
  %v111 = vpop.permute.xlu0 %110
  %114 = vset.pattern.permute.xlu0 0
  %115 = vperm.xlu0 %114, %v88
  %v116 = vpop.permute.xlu0 %115
  %119 = vset.pattern.permute.xlu0 0
  %120 = vperm.xlu0 %119, %v89
  %v121 = vpop.permute.xlu0 %120
  %124 = vset.pattern.permute.xlu0 0
  %125 = vperm.xlu0 %124, %v90
  %v126 = vpop.permute.xlu0 %125
  %129 = vset.pattern.permute.xlu0 0
  %130 = vperm.xlu0 %129, %v91
  %v131 = vpop.permute.xlu0 %130
  %134 = vset.pattern.permute.xlu0 0
  %135 = vperm.xlu0 %134, %v92
  %v136 = vpop.permute.xlu0 %135
  %139 = vset.pattern.permute.xlu0 0
  %140 = vperm.xlu0 %139, %v93
  %v141 = vpop.permute.xlu0 %140
  %144 = vset.pattern.permute.xlu0 0
  %145 = vperm.xlu0 %144, %v94
  %v146 = vpop.permute.xlu0 %145
  %149 = vset.pattern.permute.xlu0 0
  %150 = vperm.xlu0 %149, %v95
  %v151 = vpop.permute.xlu0 %150
  %154 = vset.pattern.permute.xlu0 0
  %155 = vperm.xlu0 %154, %v96
  %v156 = vpop.permute.xlu0 %155
  %159 = vset.pattern.permute.xlu0 0
  %160 = vperm.xlu0 %159, %v97
  %v161 = vpop.permute.xlu0 %160
  %164 = vset.pattern.permute.xlu0 0
  %165 = vperm.xlu0 %164, %v98
  %v166 = vpop.permute.xlu0 %165
  %169 = vset.pattern.permute.xlu0 0
  %170 = vperm.xlu0 %169, %v99
  %v171 = vpop.permute.xlu0 %170
  %174 = vset.pattern.permute.xlu0 0
  %175 = vperm.xlu0 %174, %v100
  %v176 = vpop.permute.xlu0 %175
  %179 = vset.pattern.permute.xlu0 0
  %180 = vperm.xlu0 %179, %v101
  %v181 = vpop.permute.xlu0 %180
  %v199 = vunpack.c.l.b16 %v70
  %v200 = vunpack.c.l.b16 %v71
  %v201 = vunpack.c.l.b16 %v72
  %v202 = vunpack.c.l.b16 %v73
  %v203 = vunpack.c.l.b16 %v74
  %v204 = vunpack.c.l.b16 %v75
  %v205 = vunpack.c.l.b16 %v76
  %v206 = vunpack.c.l.b16 %v77
  %v207 = vunpack.c.l.b16 %v78
  %v208 = vunpack.c.l.b16 %v79
  %v209 = vunpack.c.l.b16 %v80
  %v210 = vunpack.c.l.b16 %v81
  %v211 = vunpack.c.l.b16 %v82
  %v212 = vunpack.c.l.b16 %v83
  %v213 = vunpack.c.l.b16 %v84
  %v214 = vunpack.c.l.b16 %v85
  %v215 = vpack.c.b16 %v200, %v199
  %v216 = vpack.c.b16 %v202, %v201
  %v217 = vpack.c.b16 %v204, %v203
  %v218 = vpack.c.b16 %v206, %v205
  %v219 = vpack.c.b16 %v208, %v207
  %v220 = vpack.c.b16 %v210, %v209
  %v221 = vpack.c.b16 %v212, %v211
  %v222 = vpack.c.b16 %v214, %v213
  %vm223 = vcmask 64512
  %v225 = vsel %vm223, %v215, 0
  %v228 = vsel %vm223, %v216, 0
  %v231 = vsel %vm223, %v217, 0
  %v234 = vsel %vm223, %v218, 0
  %v237 = vsel %vm223, %v219, 0
  %v240 = vsel %vm223, %v220, 0
  %v243 = vsel %vm223, %v221, 0
  %v246 = vsel %vm223, %v222, 0
  %vm248 = vcmask 1043456
  %v250 = vsel %vm248, %v69, 0
  %252 = vmatprep.subr.bf16.mxu0 0
  %253 = vmatpush1.bf16.msra.mxu0 %v250
  %254 = vmatprep.subr.bf16.mxu0 0
  %255 = vmatpush1.bf16.msra.mxu0 0
  %256 = vmatprep.subr.bf16.mxu0 0
  %257 = vmatpush1.bf16.msra.mxu0 0
  %258 = vmatprep.subr.bf16.mxu0 0
  %259 = vmatpush1.bf16.msra.mxu0 0
  %260 = vmatprep.subr.bf16.mxu0 0
  %261 = vmatpush1.bf16.msra.mxu0 0
  %262 = vmatprep.subr.bf16.mxu0 0
  %263 = vmatpush1.bf16.msra.mxu0 0
  %264 = vmatprep.subr.bf16.mxu0 0
  %265 = vmatpush1.bf16.msra.mxu0 0
  %266 = vmatprep.subr.bf16.mxu0 0
  %267 = vmatpush1.bf16.msra.mxu0 0
  %268 = vmatprep.subr.bf16.mxu0 0
  %269 = vmatpush1.bf16.msra.mxu0 0
  %270 = vmatprep.subr.bf16.mxu0 0
  %271 = vmatpush1.bf16.msra.mxu0 0
  %272 = vmatprep.subr.bf16.mxu0 0
  %273 = vmatpush1.bf16.msra.mxu0 0
  %274 = vmatprep.subr.bf16.mxu0 0
  %275 = vmatpush1.bf16.msra.mxu0 0
  %276 = vmatprep.subr.bf16.mxu0 0
  %277 = vmatpush1.bf16.msra.mxu0 0
  %278 = vmatprep.subr.bf16.mxu0 0
  %279 = vmatpush1.bf16.msra.mxu0 0
  %280 = vmatprep.subr.bf16.mxu0 0
  %281 = vmatpush1.bf16.msra.mxu0 0
  %282 = vmatprep.subr.bf16.mxu0 0
  %283 = vmatpush1.bf16.msra.mxu0 0
  %284 = vmatprep.mubr.bf16.mxu0 0
  %285 = vmatmul.mubr.bf16.gmra.mrb[0].mxu0 %v225
  %v286 = vpop.f32.mrb[0].mxu0
  %v287 = vadd.f32 %v106, %v286
  %v288 = vpop.f32.mrb[0].mxu0
  %v289 = vpop.f32.mrb[0].mxu0
  %v290 = vadd.f32 %v111, %v289
  %v291 = vpop.f32.mrb[0].mxu0
  %292 = vmatprep.mubr.bf16.mxu0 0
  %293 = vmatmul.mubr.bf16.gmra.mrb[0].mxu0 %v228
  %v294 = vpop.f32.mrb[0].mxu0
  %v295 = vadd.f32 %v116, %v294
  %v296 = vpop.f32.mrb[0].mxu0
  %v297 = vpop.f32.mrb[0].mxu0
  %v298 = vadd.f32 %v121, %v297
  %v299 = vpop.f32.mrb[0].mxu0
  %300 = vmatprep.mubr.bf16.mxu0 0
  %301 = vmatmul.mubr.bf16.gmra.mrb[0].mxu0 %v231
  %v302 = vpop.f32.mrb[0].mxu0
  %v303 = vadd.f32 %v126, %v302
  %v304 = vpop.f32.mrb[0].mxu0
  %v305 = vpop.f32.mrb[0].mxu0
  %v306 = vadd.f32 %v131, %v305
  %v307 = vpop.f32.mrb[0].mxu0
  %308 = vmatprep.mubr.bf16.mxu0 0
  %309 = vmatmul.mubr.bf16.gmra.mrb[0].mxu0 %v234
  %v310 = vpop.f32.mrb[0].mxu0
  %v311 = vadd.f32 %v136, %v310
  %v312 = vpop.f32.mrb[0].mxu0
  %v313 = vpop.f32.mrb[0].mxu0
  %v314 = vadd.f32 %v141, %v313
  %v315 = vpop.f32.mrb[0].mxu0
  %316 = vmatprep.mubr.bf16.mxu0 0
  %317 = vmatmul.mubr.bf16.gmra.mrb[0].mxu0 %v237
  %v318 = vpop.f32.mrb[0].mxu0
  %v319 = vadd.f32 %v146, %v318
  %v320 = vpop.f32.mrb[0].mxu0
  %v321 = vpop.f32.mrb[0].mxu0
  %v322 = vadd.f32 %v151, %v321
  %v323 = vpop.f32.mrb[0].mxu0
  %324 = vmatprep.mubr.bf16.mxu0 0
  %325 = vmatmul.mubr.bf16.gmra.mrb[0].mxu0 %v240
  %v326 = vpop.f32.mrb[0].mxu0
  %v327 = vadd.f32 %v156, %v326
  %v328 = vpop.f32.mrb[0].mxu0
  %v329 = vpop.f32.mrb[0].mxu0
  %v330 = vadd.f32 %v161, %v329
  %v331 = vpop.f32.mrb[0].mxu0
  %332 = vmatprep.mubr.bf16.mxu0 0
  %333 = vmatmul.mubr.bf16.gmra.mrb[0].mxu0 %v243
  %v334 = vpop.f32.mrb[0].mxu0
  %v335 = vadd.f32 %v166, %v334
  %v336 = vpop.f32.mrb[0].mxu0
  %v337 = vpop.f32.mrb[0].mxu0
  %v338 = vadd.f32 %v171, %v337
  %v339 = vpop.f32.mrb[0].mxu0
  %340 = vmatprep.mubr.bf16.mxu0 0
  %341 = vmatmul.mubr.bf16.gmra.mrb[0].mxu0 %v246
  %v342 = vpop.f32.mrb[0].mxu0
  %v343 = vadd.f32 %v176, %v342
  %v344 = vpop.f32.mrb[0].mxu0
  %v345 = vpop.f32.mrb[0].mxu0
  %v346 = vadd.f32 %v181, %v345
  %v347 = vpop.f32.mrb[0].mxu0
  %348 = vdwg.mxu0
  %v349 = vmax.f32 %v287, 0.0
  %v350 = vmax.f32 %v290, 0.0
  %v351 = vmax.f32 %v295, 0.0
  %v352 = vmax.f32 %v298, 0.0
  %v353 = vmax.f32 %v303, 0.0
  %v354 = vmax.f32 %v306, 0.0
  %v355 = vmax.f32 %v311, 0.0
  %v356 = vmax.f32 %v314, 0.0
  %v357 = vmax.f32 %v319, 0.0
  %v358 = vmax.f32 %v322, 0.0
  %v359 = vmax.f32 %v327, 0.0
  %v360 = vmax.f32 %v330, 0.0
  %v361 = vmax.f32 %v335, 0.0
  %v362 = vmax.f32 %v338, 0.0
  %v363 = vmax.f32 %v343, 0.0
  %v364 = vmax.f32 %v346, 0.0
  %v365 = vpack.c.bf16 %v350, %v349
  %v366 = vpack.c.bf16 %v352, %v351
  %v367 = vpack.c.bf16 %v354, %v353
  %v368 = vpack.c.bf16 %v356, %v355
  %v369 = vpack.c.bf16 %v358, %v357
  %v370 = vpack.c.bf16 %v360, %v359
  %v371 = vpack.c.bf16 %v362, %v361
  %v372 = vpack.c.bf16 %v364, %v363
  %v373 = vld [vmem:[%s1 + $0x40] sm:$0xf]
  %v374 = vld [vmem:[%s1 + $0x44] sm:$0xf]
  %v375 = vld [vmem:[%s1 + $0x48] sm:$0xf]
  %v376 = vld [vmem:[%s1 + $0x4c] sm:$0xf]
  %v377 = vld [vmem:[%s1 + $0x50] sm:$0xf]
  %v378 = vld [vmem:[%s1 + $0x54] sm:$0xf]
  %v379 = vld [vmem:[%s1 + $0x58] sm:$0xf]
  %v380 = vld [vmem:[%s1 + $0x5c] sm:$0xf]
  %v381 = vld [vmem:[%s1 + $0x60] sm:$0xf]
  %v382 = vld [vmem:[%s1 + $0x64] sm:$0xf]
  %v383 = vld [vmem:[%s1 + $0x68] sm:$0xf]
  %v384 = vld [vmem:[%s1 + $0x6c] sm:$0xf]
  %v385 = vld [vmem:[%s1 + $0x70] sm:$0xf]
  %v386 = vld [vmem:[%s1 + $0x74] sm:$0xf]
  %v387 = vld [vmem:[%s1 + $0x78] sm:$0xf]
  %v388 = vld [vmem:[%s1 + $0x7c] sm:$0xf]
  %v389 = vld [vmem:[%s2 + $0x80] sm:$0xff]
  %v390 = vld [vmem:[%s2 + $0x88] sm:$0xff]
  %v391 = vld [vmem:[%s2 + $0x90] sm:$0xff]
  %v392 = vld [vmem:[%s2 + $0x98] sm:$0xff]
  %v393 = vld [vmem:[%s2 + $0xa0] sm:$0xff]
  %v394 = vld [vmem:[%s2 + $0xa8] sm:$0xff]
  %v395 = vld [vmem:[%s2 + $0xb0] sm:$0xff]
  %v396 = vld [vmem:[%s2 + $0xb8] sm:$0xff]
  %v397 = vld [vmem:[%s2 + $0xc0] sm:$0xff]
  %v398 = vld [vmem:[%s2 + $0xc8] sm:$0xff]
  %v399 = vld [vmem:[%s2 + $0xd0] sm:$0xff]
  %v400 = vld [vmem:[%s2 + $0xd8] sm:$0xff]
  %v401 = vld [vmem:[%s2 + $0xe0] sm:$0xff]
  %v402 = vld [vmem:[%s2 + $0xe8] sm:$0xff]
  %v403 = vld [vmem:[%s2 + $0xf0] sm:$0xff]
  %v404 = vld [vmem:[%s2 + $0xf8] sm:$0xff]
  %v405 = vld [vmem:[%s3 + $0x2] sm:$0x3]
  %407 = vset.pattern.permute.xlu0 0
  %408 = vperm.xlu0 %407, %v389
  %v409 = vpop.permute.xlu0 %408
  %412 = vset.pattern.permute.xlu0 0
  %413 = vperm.xlu0 %412, %v390
  %v414 = vpop.permute.xlu0 %413
  %417 = vset.pattern.permute.xlu0 0
  %418 = vperm.xlu0 %417, %v391
  %v419 = vpop.permute.xlu0 %418
  %422 = vset.pattern.permute.xlu0 0
  %423 = vperm.xlu0 %422, %v392
  %v424 = vpop.permute.xlu0 %423
  %427 = vset.pattern.permute.xlu0 0
  %428 = vperm.xlu0 %427, %v393
  %v429 = vpop.permute.xlu0 %428
  %432 = vset.pattern.permute.xlu0 0
  %433 = vperm.xlu0 %432, %v394
  %v434 = vpop.permute.xlu0 %433
  %437 = vset.pattern.permute.xlu0 0
  %438 = vperm.xlu0 %437, %v395
  %v439 = vpop.permute.xlu0 %438
  %442 = vset.pattern.permute.xlu0 0
  %443 = vperm.xlu0 %442, %v396
  %v444 = vpop.permute.xlu0 %443
  %447 = vset.pattern.permute.xlu0 0
  %448 = vperm.xlu0 %447, %v397
  %v449 = vpop.permute.xlu0 %448
  %452 = vset.pattern.permute.xlu0 0
  %453 = vperm.xlu0 %452, %v398
  %v454 = vpop.permute.xlu0 %453
  %457 = vset.pattern.permute.xlu0 0
  %458 = vperm.xlu0 %457, %v399
  %v459 = vpop.permute.xlu0 %458
  %462 = vset.pattern.permute.xlu0 0
  %463 = vperm.xlu0 %462, %v400
  %v464 = vpop.permute.xlu0 %463
  %467 = vset.pattern.permute.xlu0 0
  %468 = vperm.xlu0 %467, %v401
  %v469 = vpop.permute.xlu0 %468
  %472 = vset.pattern.permute.xlu0 0
  %473 = vperm.xlu0 %472, %v402
  %v474 = vpop.permute.xlu0 %473
  %477 = vset.pattern.permute.xlu0 0
  %478 = vperm.xlu0 %477, %v403
  %v479 = vpop.permute.xlu0 %478
  %482 = vset.pattern.permute.xlu0 0
  %483 = vperm.xlu0 %482, %v404
  %v484 = vpop.permute.xlu0 %483
  %v502 = vunpack.c.l.b16 %v373
  %v503 = vunpack.c.l.b16 %v374
  %v504 = vunpack.c.l.b16 %v375
  %v505 = vunpack.c.l.b16 %v376
  %v506 = vunpack.c.l.b16 %v377
  %v507 = vunpack.c.l.b16 %v378
  %v508 = vunpack.c.l.b16 %v379
  %v509 = vunpack.c.l.b16 %v380
  %v510 = vunpack.c.l.b16 %v381
  %v511 = vunpack.c.l.b16 %v382
  %v512 = vunpack.c.l.b16 %v383
  %v513 = vunpack.c.l.b16 %v384
  %v514 = vunpack.c.l.b16 %v385
  %v515 = vunpack.c.l.b16 %v386
  %v516 = vunpack.c.l.b16 %v387
  %v517 = vunpack.c.l.b16 %v388
  %v518 = vpack.c.b16 %v503, %v502
  %v519 = vpack.c.b16 %v505, %v504
  %v520 = vpack.c.b16 %v507, %v506
  %v521 = vpack.c.b16 %v509, %v508
  %v522 = vpack.c.b16 %v511, %v510
  %v523 = vpack.c.b16 %v513, %v512
  %v524 = vpack.c.b16 %v515, %v514
  %v525 = vpack.c.b16 %v517, %v516
  %v527 = vsel %vm223, %v518, 0
  %v530 = vsel %vm223, %v519, 0
  %v533 = vsel %vm223, %v520, 0
  %v536 = vsel %vm223, %v521, 0
  %v539 = vsel %vm223, %v522, 0
  %v542 = vsel %vm223, %v523, 0
  %v545 = vsel %vm223, %v524, 0
  %v548 = vsel %vm223, %v525, 0
  %550 = vmatprep.subr.bf16.mxu0 0
  %551 = vmatpush1.bf16.msra.mxu0 %v250
  %552 = vmatprep.subr.bf16.mxu0 0
  %553 = vmatpush1.bf16.msra.mxu0 0
  %554 = vmatprep.subr.bf16.mxu0 0
  %555 = vmatpush1.bf16.msra.mxu0 0
  %556 = vmatprep.subr.bf16.mxu0 0
  %557 = vmatpush1.bf16.msra.mxu0 0
  %558 = vmatprep.subr.bf16.mxu0 0
  %559 = vmatpush1.bf16.msra.mxu0 0
  %560 = vmatprep.subr.bf16.mxu0 0
  %561 = vmatpush1.bf16.msra.mxu0 0
  %562 = vmatprep.subr.bf16.mxu0 0
  %563 = vmatpush1.bf16.msra.mxu0 0
  %564 = vmatprep.subr.bf16.mxu0 0
  %565 = vmatpush1.bf16.msra.mxu0 0
  %566 = vmatprep.subr.bf16.mxu0 0
  %567 = vmatpush1.bf16.msra.mxu0 0
  %568 = vmatprep.subr.bf16.mxu0 0
  %569 = vmatpush1.bf16.msra.mxu0 0
  %570 = vmatprep.subr.bf16.mxu0 0
  %571 = vmatpush1.bf16.msra.mxu0 0
  %572 = vmatprep.subr.bf16.mxu0 0
  %573 = vmatpush1.bf16.msra.mxu0 0
  %574 = vmatprep.subr.bf16.mxu0 0
  %575 = vmatpush1.bf16.msra.mxu0 0
  %576 = vmatprep.subr.bf16.mxu0 0
  %577 = vmatpush1.bf16.msra.mxu0 0
  %578 = vmatprep.subr.bf16.mxu0 0
  %579 = vmatpush1.bf16.msra.mxu0 0
  %580 = vmatprep.subr.bf16.mxu0 0
  %581 = vmatpush1.bf16.msra.mxu0 0
  %582 = vmatprep.mubr.bf16.mxu0 0
  %583 = vmatmul.mubr.bf16.gmra.mrb[0].mxu0 %v527
  %v584 = vpop.f32.mrb[0].mxu0
  %v585 = vadd.f32 %v409, %v584
  %v586 = vpop.f32.mrb[0].mxu0
  %v587 = vpop.f32.mrb[0].mxu0
  %v588 = vadd.f32 %v414, %v587
  %v589 = vpop.f32.mrb[0].mxu0
  %590 = vmatprep.mubr.bf16.mxu0 0
  %591 = vmatmul.mubr.bf16.gmra.mrb[0].mxu0 %v530
  %v592 = vpop.f32.mrb[0].mxu0
  %v593 = vadd.f32 %v419, %v592
  %v594 = vpop.f32.mrb[0].mxu0
  %v595 = vpop.f32.mrb[0].mxu0
  %v596 = vadd.f32 %v424, %v595
  %v597 = vpop.f32.mrb[0].mxu0
  %598 = vmatprep.mubr.bf16.mxu0 0
  %599 = vmatmul.mubr.bf16.gmra.mrb[0].mxu0 %v533
  %v600 = vpop.f32.mrb[0].mxu0
  %v601 = vadd.f32 %v429, %v600
  %v602 = vpop.f32.mrb[0].mxu0
  %v603 = vpop.f32.mrb[0].mxu0
  %v604 = vadd.f32 %v434, %v603
  %v605 = vpop.f32.mrb[0].mxu0
  %606 = vmatprep.mubr.bf16.mxu0 0
  %607 = vmatmul.mubr.bf16.gmra.mrb[0].mxu0 %v536
  %v608 = vpop.f32.mrb[0].mxu0
  %v609 = vadd.f32 %v439, %v608
  %v610 = vpop.f32.mrb[0].mxu0
  %v611 = vpop.f32.mrb[0].mxu0
  %v612 = vadd.f32 %v444, %v611
  %v613 = vpop.f32.mrb[0].mxu0
  %614 = vmatprep.mubr.bf16.mxu0 0
  %615 = vmatmul.mubr.bf16.gmra.mrb[0].mxu0 %v539
  %v616 = vpop.f32.mrb[0].mxu0
  %v617 = vadd.f32 %v449, %v616
  %v618 = vpop.f32.mrb[0].mxu0
  %v619 = vpop.f32.mrb[0].mxu0
  %v620 = vadd.f32 %v454, %v619
  %v621 = vpop.f32.mrb[0].mxu0
  %622 = vmatprep.mubr.bf16.mxu0 0
  %623 = vmatmul.mubr.bf16.gmra.mrb[0].mxu0 %v542
  %v624 = vpop.f32.mrb[0].mxu0
  %v625 = vadd.f32 %v459, %v624
  %v626 = vpop.f32.mrb[0].mxu0
  %v627 = vpop.f32.mrb[0].mxu0
  %v628 = vadd.f32 %v464, %v627
  %v629 = vpop.f32.mrb[0].mxu0
  %630 = vmatprep.mubr.bf16.mxu0 0
  %631 = vmatmul.mubr.bf16.gmra.mrb[0].mxu0 %v545
  %v632 = vpop.f32.mrb[0].mxu0
  %v633 = vadd.f32 %v469, %v632
  %v634 = vpop.f32.mrb[0].mxu0
  %v635 = vpop.f32.mrb[0].mxu0
  %v636 = vadd.f32 %v474, %v635
  %v637 = vpop.f32.mrb[0].mxu0
  %638 = vmatprep.mubr.bf16.mxu0 0
  %639 = vmatmul.mubr.bf16.gmra.mrb[0].mxu0 %v548
  %v640 = vpop.f32.mrb[0].mxu0
  %v641 = vadd.f32 %v479, %v640
  %v642 = vpop.f32.mrb[0].mxu0
  %v643 = vpop.f32.mrb[0].mxu0
  %v644 = vadd.f32 %v484, %v643
  %v645 = vpop.f32.mrb[0].mxu0
  %646 = vdwg.mxu0
  %v647 = vmax.f32 %v585, 0.0
  %v648 = vmax.f32 %v588, 0.0
  %v649 = vmax.f32 %v593, 0.0
  %v650 = vmax.f32 %v596, 0.0
  %v651 = vmax.f32 %v601, 0.0
  %v652 = vmax.f32 %v604, 0.0
  %v653 = vmax.f32 %v609, 0.0
  %v654 = vmax.f32 %v612, 0.0
  %v655 = vmax.f32 %v617, 0.0
  %v656 = vmax.f32 %v620, 0.0
  %v657 = vmax.f32 %v625, 0.0
  %v658 = vmax.f32 %v628, 0.0
  %v659 = vmax.f32 %v633, 0.0
  %v660 = vmax.f32 %v636, 0.0
  %v661 = vmax.f32 %v641, 0.0
  %v662 = vmax.f32 %v644, 0.0
  %v663 = vpack.c.bf16 %v648, %v647
  %v664 = vpack.c.bf16 %v650, %v649
  %v665 = vpack.c.bf16 %v652, %v651
  %v666 = vpack.c.bf16 %v654, %v653
  %v667 = vpack.c.bf16 %v656, %v655
  %v668 = vpack.c.bf16 %v658, %v657
  %v669 = vpack.c.bf16 %v660, %v659
  %v670 = vpack.c.bf16 %v662, %v661
  %671 = vmatprep.subr.bf16.mxu0 0
  %672 = vmatpush1.bf16.msra.mxu0 %v663
  %673 = vmatprep.subr.bf16.mxu0 0
  %674 = vmatpush1.bf16.msra.mxu0 %v664
  %675 = vmatprep.subr.bf16.mxu0 0
  %676 = vmatpush1.bf16.msra.mxu0 %v665
  %677 = vmatprep.subr.bf16.mxu0 0
  %678 = vmatpush1.bf16.msra.mxu0 %v666
  %679 = vmatprep.subr.bf16.mxu0 0
  %680 = vmatpush1.bf16.msra.mxu0 %v667
  %681 = vmatprep.subr.bf16.mxu0 0
  %682 = vmatpush1.bf16.msra.mxu0 %v668
  %683 = vmatprep.subr.bf16.mxu0 0
  %684 = vmatpush1.bf16.msra.mxu0 %v669
  %685 = vmatprep.subr.bf16.mxu0 0
  %686 = vmatpush1.bf16.msra.mxu0 %v670
  %687 = vmatprep.subr.bf16.mxu0 0
  %688 = vmatpush1.bf16.msra.mxu0 0
  %689 = vmatprep.subr.bf16.mxu0 0
  %690 = vmatpush1.bf16.msra.mxu0 0
  %691 = vmatprep.subr.bf16.mxu0 0
  %692 = vmatpush1.bf16.msra.mxu0 0
  %693 = vmatprep.subr.bf16.mxu0 0
  %694 = vmatpush1.bf16.msra.mxu0 0
  %695 = vmatprep.subr.bf16.mxu0 0
  %696 = vmatpush1.bf16.msra.mxu0 0
  %697 = vmatprep.subr.bf16.mxu0 0
  %698 = vmatpush1.bf16.msra.mxu0 0
  %699 = vmatprep.subr.bf16.mxu0 0
  %700 = vmatpush1.bf16.msra.mxu0 0
  %701 = vmatprep.subr.bf16.mxu0 0
  %702 = vmatpush1.bf16.msra.mxu0 0
  %703 = vmatprep.mubr.bf16.mxu0 0
  %704 = vmatmul.mubr.bf16.gmra.mrb[0].mxu0 %v405
  %v705 = vpop.f32.mrb[0].mxu0
  %v706 = vadd.f32 0.0, %v705
  %v707 = vpop.f32.mrb[0].mxu0
  %v708 = vpop.f32.mrb[0].mxu0
  %v709 = vpop.f32.mrb[0].mxu0
  %710 = vdwg.mxu0
  %711 = vmatprep.subr.bf16.mxu0 0
  %712 = vmatpush1.bf16.msra.mxu0 %v365
  %713 = vmatprep.subr.bf16.mxu0 0
  %714 = vmatpush1.bf16.msra.mxu0 %v366
  %715 = vmatprep.subr.bf16.mxu0 0
  %716 = vmatpush1.bf16.msra.mxu0 %v367
  %717 = vmatprep.subr.bf16.mxu0 0
  %718 = vmatpush1.bf16.msra.mxu0 %v368
  %719 = vmatprep.subr.bf16.mxu0 0
  %720 = vmatpush1.bf16.msra.mxu0 %v369
  %721 = vmatprep.subr.bf16.mxu0 0
  %722 = vmatpush1.bf16.msra.mxu0 %v370
  %723 = vmatprep.subr.bf16.mxu0 0
  %724 = vmatpush1.bf16.msra.mxu0 %v371
  %725 = vmatprep.subr.bf16.mxu0 0
  %726 = vmatpush1.bf16.msra.mxu0 %v372
  %727 = vmatprep.subr.bf16.mxu0 0
  %728 = vmatpush1.bf16.msra.mxu0 0
  %729 = vmatprep.subr.bf16.mxu0 0
  %730 = vmatpush1.bf16.msra.mxu0 0
  %731 = vmatprep.subr.bf16.mxu0 0
  %732 = vmatpush1.bf16.msra.mxu0 0
  %733 = vmatprep.subr.bf16.mxu0 0
  %734 = vmatpush1.bf16.msra.mxu0 0
  %735 = vmatprep.subr.bf16.mxu0 0
  %736 = vmatpush1.bf16.msra.mxu0 0
  %737 = vmatprep.subr.bf16.mxu0 0
  %738 = vmatpush1.bf16.msra.mxu0 0
  %739 = vmatprep.subr.bf16.mxu0 0
  %740 = vmatpush1.bf16.msra.mxu0 0
  %741 = vmatprep.subr.bf16.mxu0 0
  %742 = vmatpush1.bf16.msra.mxu0 0
  %743 = vmatprep.mubr.bf16.mxu0 0
  %744 = vmatmul.mubr.bf16.gmra.mrb[0].mxu0 %v102
  %v745 = vpop.f32.mrb[0].mxu0
  %v746 = vadd.f32 %v706, %v745
  %v747 = vpop.f32.mrb[0].mxu0
  %v748 = vpop.f32.mrb[0].mxu0
  %v749 = vpop.f32.mrb[0].mxu0
  %750 = vdwg.mxu0
  %v751 = vld [vmem:[%s4] sm:$0xf]
  %753 = vset.pattern.permute.xlu0 0
  %754 = vperm.xlu0 %753, %v751
  %v755 = vpop.permute.xlu0 %754
  %v757 = vadd.f32 %v746, %v755
  %v758 = vsel %vm248, %v757, -inf
  %v759 = vrot.slane %v758, 4
  %v760 = vmax.f32 %v758, %v759
  %v761 = vrot.slane %v760, 2
  %v762 = vmax.f32 %v760, %v761
  %v763 = vrot.slane %v762, 1
  %v764 = vmax.f32 %v762, %v763
  %v765 = vsub.f32 %v757, %v764
  %v766 = vmul.f32 %v765, 1.442695
  %v767 = vpow.pop %v766
  %v768 = vsel %vm248, %v767, 0.0
  %v769 = vrot.slane %v768, 4
  %v770 = vadd.f32 %v768, %v769
  %v771 = vrot.slane %v770, 2
  %v772 = vadd.f32 %v770, %v771
  %v773 = vrot.slane %v772, 1
  %v774 = vadd.f32 %v772, %v773
  %v775 = vrcp.pop %v774
  %v776 = vmul.f32 %v767, %v775
  %777 = vst [vmem:[%s5] sm:$0xf] %v776
  // Predicated region
  $region22: #{tpu_custom_call.1} parent=0 // pred_check
    _
  $region23: #{tpu_custom_call.1} parent=0 // pred_check_branch
    %779 = sbr.rel (0) target = $region25
  $region24: #{tpu_custom_call.1} parent=0 // pred_region
    _
  $region25: #{tpu_custom_call.1} parent=0 // pred_fallthru
    _
  // Predicated region
  $region26: #{tpu_custom_call.1} parent=0 // pred_check
    _
  $region27: #{tpu_custom_call.1} parent=0 // pred_check_branch
    %781 = sbr.rel (0) target = $region29
  $region28: #{tpu_custom_call.1} parent=0 // pred_region
    _
  $region29: #{tpu_custom_call.1} parent=0 // pred_fallthru
    _

</llo_original>
